<compile_context>
chip_gen: v7x
topology: tpu7x:2x2x1
jax: 0.10.0
libtpu: 0.0.40
codegen_flags: <defaults>
</compile_context>

<pallas_src>
import jax
import jax.numpy as jnp
from jax import lax
from jax.experimental import pallas as pl
from jax.experimental.pallas import tpu as pltpu


def _round_up(x, m):
    return ((x + m - 1) // m) * m


def _pick_tile(dim_p, t_max, unit):
    """Largest multiple of `unit` that divides dim_p and is <= t_max (>= unit)."""
    t = min(dim_p, max(unit, (t_max // unit) * unit))
    while dim_p % t != 0:
        t -= unit
    return t


# --------------------------------------------------------------------------- #
# Kernels
# --------------------------------------------------------------------------- #
def _linear_kernel_fused(x_ref, w_ref, b_ref, o_ref):
    """Single-K path: x (TB, Fp) @ w (Fp, TC) + b (1, TC) -> o (TB, TC)."""
    acc = jnp.dot(x_ref[...].astype(w_ref.dtype), w_ref[...],
                  preferred_element_type=jnp.float32)
    o_ref[...] = (acc + b_ref[...]).astype(o_ref.dtype)


def _linear_kernel_ktiled_f32out(x_ref, w_ref, b_ref, o_ref):
    """K-tiled path, f32 output: accumulate directly into the resident o block."""
    k = pl.program_id(2)

    @pl.when(k == 0)
    def _():
        o_ref[...] = jnp.broadcast_to(b_ref[...], o_ref.shape)

    o_ref[...] += jnp.dot(x_ref[...].astype(w_ref.dtype), w_ref[...],
                          preferred_element_type=jnp.float32)


def _linear_kernel_ktiled_acc(x_ref, w_ref, b_ref, o_ref, acc_ref):
    """K-tiled path, non-f32 output: f32 VMEM accumulator, cast on the last step."""
    k = pl.program_id(2)

    @pl.when(k == 0)
    def _():
        acc_ref[...] = jnp.zeros_like(acc_ref)

    acc_ref[...] += jnp.dot(x_ref[...].astype(w_ref.dtype), w_ref[...],
                            preferred_element_type=jnp.float32)

    @pl.when(k == pl.num_programs(2) - 1)
    def _():
        o_ref[...] = (acc_ref[...] + b_ref[...]).astype(o_ref.dtype)


# --------------------------------------------------------------------------- #
# Parameter preparation (do this ONCE, outside the step / per-call path)
# --------------------------------------------------------------------------- #
def prepare_classifier_head_params(weight, bias, *, param_dtype=jnp.bfloat16):
    """Convert PyTorch nn.Linear params for the kernel.

    weight: (C, F) torch layout -> returns w_fc (Fp, Cp) in param_dtype (transposed,
    128-aligned, zero padded) and bias (1, Cp) f32. Persist these; do NOT redo per call.
    """
    C, F = weight.shape
    Fp = _round_up(F, 128)
    Cp = _round_up(C, 128)
    w_fc = jnp.asarray(weight).T.astype(param_dtype)          # (F, C), one-time cost
    if (Fp, Cp) != (F, C):
        w_fc = jnp.pad(w_fc, ((0, Fp - F), (0, Cp - C)))
    b = jnp.asarray(bias).astype(jnp.float32)
    if Cp != C:
        b = jnp.pad(b, (0, Cp - C))
    return w_fc, b.reshape(1, Cp), C


# --------------------------------------------------------------------------- #
# Wrapper
# --------------------------------------------------------------------------- #
def classifier_head_apply(x, w_fc, b_row, num_classes, *,
                          tb_max=256, tc_max=1024, tk_max=1024,
                          single_k_vmem_budget=40 * 1024 * 1024):
    """logits = x @ W.T + b with prepared params (w_fc = padded (Fp, Cp) bf16)."""
    B, F = x.shape
    Fp, Cp = w_fc.shape
    assert F <= Fp and num_classes <= Cp
    out_dtype = x.dtype
    x_itemsize = jnp.dtype(x.dtype).itemsize
    w_itemsize = jnp.dtype(w_fc.dtype).itemsize
    out_itemsize = jnp.dtype(out_dtype).itemsize

    # Sublane multiple for the batch axis (f32: 8, bf16: 16, int8: 32).
    sub = max(8, 32 // x_itemsize)
    Bp = _round_up(B, sub)

    # Pad x only to lane/sublane alignment (zero-padded F columns contribute 0).
    xp = x if (Bp == B and Fp == F) else jnp.pad(x, ((0, Bp - B), (0, Fp - F)))

    # Tiles are divisors of the aligned dims -> no tile-multiple padding needed.
    TB = _pick_tile(Bp, tb_max, sub)
    TC = _pick_tile(Cp, tc_max, 128)

    def footprint(tk, with_scratch):
        f = 2 * (TB * tk * x_itemsize + tk * TC * w_itemsize
                 + TB * TC * out_itemsize + TC * 4)
        if with_scratch:
            f += TB * TC * 4
        return f

    single_k = footprint(Fp, False) <= single_k_vmem_budget
    if single_k:
        TK = Fp
        grid = (Bp // TB, Cp // TC)
        in_specs = [
            pl.BlockSpec((TB, Fp), lambda i, j: (i, 0)),   # x resident across classes
            pl.BlockSpec((Fp, TC), lambda i, j: (0, j)),   # weight streamed per class tile
            pl.BlockSpec((1, TC), lambda i, j: (0, j)),
        ]
        out_specs = pl.BlockSpec((TB, TC), lambda i, j: (i, j))
        kernel = _linear_kernel_fused
        scratch = ()
        dims = ("parallel", "parallel")
        x_reads = 1
        needs_scratch = False
    else:
        TK = _pick_tile(Fp, tk_max, 128)
        grid = (Bp // TB, Cp // TC, Fp // TK)
        in_specs = [
            pl.BlockSpec((TB, TK), lambda i, j, k: (i, k)),
            pl.BlockSpec((TK, TC), lambda i, j, k: (k, j)),
            pl.BlockSpec((1, TC), lambda i, j, k: (0, j)),
        ]
        out_specs = pl.BlockSpec((TB, TC), lambda i, j, k: (i, j))
        if out_dtype == jnp.float32:
            kernel = _linear_kernel_ktiled_f32out
            scratch = ()
            needs_scratch = False
        else:
            kernel = _linear_kernel_ktiled_acc
            scratch = (pltpu.VMEM((TB, TC), jnp.float32),)
            needs_scratch = True
        dims = ("parallel", "parallel", "arbitrary")
        x_reads = Cp // TC   # x tile is re-streamed once per class tile when K is tiled

    vmem_needed = footprint(TK, needs_scratch)
    vmem_limit = int(min(48 * 1024 * 1024, max(32 * 1024 * 1024, vmem_needed * 5 // 4)))

    flops = 2 * Bp * Fp * Cp
    bytes_accessed = (
        Bp * Fp * x_itemsize * x_reads
        + Fp * Cp * w_itemsize
        + Cp * 4
        + Bp * Cp * out_itemsize
    )

    out = pl.pallas_call(
        kernel,
        out_shape=jax.ShapeDtypeStruct((Bp, Cp), out_dtype),
        grid_spec=pltpu.PrefetchScalarGridSpec(
            num_scalar_prefetch=0,
            grid=grid,
            in_specs=in_specs,
            out_specs=out_specs,
            scratch_shapes=scratch,
        ),
        compiler_params=pltpu.CompilerParams(
            dimension_semantics=dims,
            vmem_limit_bytes=vmem_limit,
        ),
        cost_estimate=pl.CostEstimate(
            flops=flops, transcendentals=0, bytes_accessed=bytes_accessed),
    )(xp, w_fc, b_row)

    if Bp == B and Cp == num_classes:
        return out
    return out[:B, :num_classes]


def classifier_head(x, weight, bias, **kwargs):
    """Convenience wrapper (demo): prepare + apply. In production, hoist
    prepare_classifier_head_params() out of the per-step path."""
    w_fc, b_row, C = prepare_classifier_head_params(weight, bias)
    return classifier_head_apply(x, w_fc, b_row, C, **kwargs)


# --------------------------------------------------------------------------- #
# Demo / correctness checks
# --------------------------------------------------------------------------- #
if __name__ == "__main__":
    key = jax.random.PRNGKey(0)

    # --- 1) Small shapes consistent with the module (single-K fused path) ---
    B, F, C = 8, 32, 16
    kx, kw, kb = jax.random.split(key, 3)
    x = jax.random.normal(kx, (B, F), dtype=jnp.float32)
    weight = jax.random.normal(kw, (C, F), dtype=jnp.float32) * (1.0 / jnp.sqrt(F))
    bias = jax.random.normal(kb, (C,), dtype=jnp.float32) * 0.01

    logits = classifier_head(x, weight, bias)
    jax.block_until_ready(logits)
    assert logits.shape == (B, C)
    ref = x @ weight.T + bias
    assert jnp.allclose(logits, ref, atol=5e-2, rtol=5e-2), "mismatch (small / fused)"

    # --- 2) K-tiled path, f32 output (accumulate directly into o_ref) ---
    B2, F2, C2 = 16, 256, 256
    kx2, kw2, kb2 = jax.random.split(jax.random.PRNGKey(1), 3)
    x2 = jax.random.normal(kx2, (B2, F2), dtype=jnp.float32)
    w2 = jax.random.normal(kw2, (C2, F2), dtype=jnp.float32) * (1.0 / jnp.sqrt(F2))
    b2 = jax.random.normal(kb2, (C2,), dtype=jnp.float32) * 0.01

    logits2 = classifier_head(x2, w2, b2, tb_max=16, tc_max=128, tk_max=128,
                              single_k_vmem_budget=0)   # force the K-tiled path
    jax.block_until_ready(logits2)
    ref2 = jnp.dot(x2, w2.T, precision=lax.Precision.HIGHEST) + b2
    assert jnp.allclose(logits2, ref2, atol=5e-2, rtol=5e-2), "mismatch (K-tiled f32)"

    # --- 3) K-tiled path, bf16 output (f32 VMEM accumulator variant) ---
    B3, F3, C3 = 32, 384, 256
    kx3, kw3, kb3 = jax.random.split(jax.random.PRNGKey(2), 3)
    x3 = jax.random.normal(kx3, (B3, F3), dtype=jnp.bfloat16)
    w3 = jax.random.normal(kw3, (C3, F3), dtype=jnp.float32) * (1.0 / jnp.sqrt(F3))
    b3 = jax.random.normal(kb3, (C3,), dtype=jnp.float32) * 0.01

    logits3 = classifier_head(x3, w3, b3, tb_max=32, tc_max=128, tk_max=128,
                              single_k_vmem_budget=0)
    jax.block_until_ready(logits3)
    ref3 = jnp.dot(x3.astype(jnp.float32), w3.T,
                   precision=lax.Precision.HIGHEST) + b3
    assert jnp.allclose(logits3.astype(jnp.float32), ref3,
                        atol=5e-2, rtol=5e-2), "mismatch (K-tiled bf16 acc)"

    print("KERNEL_OK")
</pallas_src>

<mosaic_0001>
module attributes {stable_mosaic.version = 11 : i64} {
  func.func @_linear_kernel_fused(%arg0: i32, %arg1: i32, %arg2: memref<8x128xf32, #tpu.memory_space<vmem>>, %arg3: memref<128x128xbf16, #tpu.memory_space<vmem>>, %arg4: memref<1x128xf32, #tpu.memory_space<vmem>>, %arg5: memref<8x128xf32, #tpu.memory_space<vmem>>) attributes {dimension_semantics = [#tpu.dimension_semantics<parallel>, #tpu.dimension_semantics<parallel>], iteration_bounds = array<i64: 1, 1>, scalar_prefetch = 0 : i64, scratch_operands = 0 : i64, tpu.core_type = #tpu.core_type<tc>, window_params = [{transform_indices = @transform_0, window_bounds = array<i64: 8, 128>}, {transform_indices = @transform_1, window_bounds = array<i64: 128, 128>}, {transform_indices = @transform_2, window_bounds = array<i64: 1, 128>}, {transform_indices = @transform_3, window_bounds = array<i64: 8, 128>}]} {
    %c0 = arith.constant 0 : index
    %c0_0 = arith.constant 0 : index
    %0 = vector.load %arg2[%c0, %c0_0] : memref<8x128xf32, #tpu.memory_space<vmem>>, vector<8x128xf32>
    %1 = arith.truncf %0 : vector<8x128xf32> to vector<8x128xbf16>
    %c0_1 = arith.constant 0 : index
    %c0_2 = arith.constant 0 : index
    %2 = vector.load %arg3[%c0_1, %c0_2] : memref<128x128xbf16, #tpu.memory_space<vmem>>, vector<128x128xbf16>
    %cst = arith.constant dense<0.000000e+00> : vector<8x128xf32>
    %3 = tpu.matmul %1, %2, %cst {dimension_numbers = #tpu.dot_dimension_numbers<[1], [0], [0], [1], [0, 0, 1, 1], [], []>} : vector<8x128xbf16>, vector<128x128xbf16>, vector<8x128xf32> -> vector<8x128xf32>
    %c0_3 = arith.constant 0 : index
    %c0_4 = arith.constant 0 : index
    %4 = vector.load %arg4[%c0_3, %c0_4] : memref<1x128xf32, #tpu.memory_space<vmem>>, vector<1x128xf32>
    %5 = vector.broadcast %4 : vector<1x128xf32> to vector<8x128xf32>
    %6 = arith.addf %3, %5 : vector<8x128xf32>
    %c0_5 = arith.constant 0 : index
    %c0_6 = arith.constant 0 : index
    %7 = vector.load %arg5[%c0_5, %c0_6] : memref<8x128xf32, #tpu.memory_space<vmem>>, vector<8x128xf32>
    tpu.vector_store %arg5[%c0_5, %c0_6], %6 {strides = array<i32>} : memref<8x128xf32, #tpu.memory_space<vmem>>, vector<8x128xf32>,
    return
  }
  func.func @transform_0(%arg0: i32, %arg1: i32) -> (i32, i32) {
    %c0_i32 = arith.constant 0 : i32
    %c0_i32_0 = arith.constant 0 : i32
    return %arg0, %c0_i32 : i32, i32
  }
  func.func @transform_1(%arg0: i32, %arg1: i32) -> (i32, i32) {
    %c0_i32 = arith.constant 0 : i32
    %c0_i32_0 = arith.constant 0 : i32
    return %c0_i32, %arg1 : i32, i32
  }
  func.func @transform_2(%arg0: i32, %arg1: i32) -> (i32, i32) {
    %c0_i32 = arith.constant 0 : i32
    %c0_i32_0 = arith.constant 0 : i32
    return %c0_i32, %arg1 : i32, i32
  }
  func.func @transform_3(%arg0: i32, %arg1: i32) -> (i32, i32) {
    %c0_i32 = arith.constant 0 : i32
    return %arg0, %arg1 : i32, i32
  }
}

</mosaic_0001>

<llo_original>
// kernel: tpu_custom_call.1
$region0: #{tpu_custom_call.1}
  #allocation0 [shape = 'u32[]', space=smem, size = 0x4, offset = 0x4, fixed_abs, tag = 'smem constant byte address 0x4 - core index']
  #allocation1 [shape = 'u32[144,128]{1,0:T(1,128)}', space=vmem, size = 0x12000, scoped, tag = 'internal scratch']
  %s0 = inlined_call_operand.hbm [shape: f32[8,128], index: 0, kind: input, shape index: {}]
  %s1 = inlined_call_operand.hbm [shape: bf16[128,128], index: 1, kind: input, shape index: {}]
  %s2 = inlined_call_operand.vmem [shape: f32[1,128], index: 2, kind: input, shape index: {}]
  %s3 = inlined_call_operand.hbm [shape: f32[8,128], index: 3, kind: output, shape index: {}]
  %s4 = sld [smem:[#allocation0]]
  $region30: #{tpu_custom_call.1} parent=0
    _
  %s6 = ssub.s32 1, %s4
  %s7 = scalar_select 0, %s6, %s4
  $region1: #{tpu_custom_call.1} parent=0
    #allocation2 [shape = 'u8[4096]{0}', space=vmem, size = 0x1000, scoped, tag = 'input window, operand 0, single buffered']
    #allocation3 [shape = 's32[1]{0}', space=sflag, size = 0x4, scoped, tag = 'scoped memory for tpu_custom_call.1']
    #allocation4 [shape = 's32[1]{0}', space=sflag, size = 0x4, scoped, tag = 'scoped memory for tpu_custom_call.1']
    #allocation5 [shape = 'u8[32768]{0}', space=vmem, size = 0x8000, scoped, tag = 'input window, operand 1, single buffered']
    #allocation6 [shape = 's32[1]{0}', space=sflag, size = 0x4, scoped, tag = 'scoped memory for tpu_custom_call.1']
    #allocation7 [shape = 'u8[4096]{0}', space=vmem, size = 0x1000, scoped, tag = 'output window, operand 0, single buffered']
    %8 = vsyncpa [#allocation3], 0
    %9 = vsyncpa [#allocation6], 0
    %10 = vsyncpa [#allocation4], 0
    // Predicated region
    $region2: #{tpu_custom_call.1} parent=1 // pred_check
      _
    $region3: #{tpu_custom_call.1} parent=1 // pred_check_branch
      %12 = sbr.rel (0) target = $region5
    $region4: #{tpu_custom_call.1} parent=1 // pred_region
      %s14 = ssub.s32 128, 128
      %15 = vsyncadd [#allocation3], %s14
      %s17 = sshll.u32 [#allocation2], 4
      %s18 = int_to_ptr.vmem [resolvable:$true] %s17
      %20 = dma.hbm_to_vmem [thread:$0]  %s0, 128, %s18, [#allocation3]
    $region5: #{tpu_custom_call.1} parent=1 // pred_fallthru
      _
    // Predicated region
    $region6: #{tpu_custom_call.1} parent=1 // pred_check
      _
    $region7: #{tpu_custom_call.1} parent=1 // pred_check_branch
      %22 = sbr.rel (0) target = $region9
    $region8: #{tpu_custom_call.1} parent=1 // pred_region
      %s24 = ssub.s32 1024, 1024
      %25 = vsyncadd [#allocation6], %s24
      %s26 = sshll.u32 [#allocation5], 4
      %s27 = int_to_ptr.vmem [resolvable:$true] %s26
      %32 = dma.hbm_to_vmem [thread:$0]  %s1, 1024, %s27, [#allocation6], 64, 64, 4
    $region9: #{tpu_custom_call.1} parent=1 // pred_fallthru
      _
    // Predicated region
    $region10: #{tpu_custom_call.1} parent=1 // pred_check
      _
    $region11: #{tpu_custom_call.1} parent=1 // pred_check_branch
      %34 = sbr.rel (0) target = $region13
    $region12: #{tpu_custom_call.1} parent=1 // pred_region
      _
    $region13: #{tpu_custom_call.1} parent=1 // pred_fallthru
      _
    // Predicated region
    $region14: #{tpu_custom_call.1} parent=1 // pred_check
      _
    $region15: #{tpu_custom_call.1} parent=1 // pred_check_branch
      %36 = sbr.rel (0) target = $region17
    $region16: #{tpu_custom_call.1} parent=1 // pred_region
      %37 = dma.done [#allocation3], 128
    $region17: #{tpu_custom_call.1} parent=1 // pred_fallthru
      _
    // Predicated region
    $region18: #{tpu_custom_call.1} parent=1 // pred_check
      _
    $region19: #{tpu_custom_call.1} parent=1 // pred_check_branch
      %39 = sbr.rel (0) target = $region21
    $region20: #{tpu_custom_call.1} parent=1 // pred_region
      %40 = dma.done [#allocation6], 1024
    $region21: #{tpu_custom_call.1} parent=1 // pred_fallthru
      _
    %v42 = vld [vmem:[#allocation2] sm:$0xff]
    %v43 = vpack.c.bf16 %v42, %v42
    %v44 = vld [vmem:[#allocation5] sm:$0xf]
    %v45 = vld [vmem:[#allocation5 + $0x4] sm:$0xf]
    %v46 = vld [vmem:[#allocation5 + $0x8] sm:$0xf]
    %v47 = vld [vmem:[#allocation5 + $0xc] sm:$0xf]
    %v48 = vld [vmem:[#allocation5 + $0x10] sm:$0xf]
    %v49 = vld [vmem:[#allocation5 + $0x14] sm:$0xf]
    %v50 = vld [vmem:[#allocation5 + $0x18] sm:$0xf]
    %v51 = vld [vmem:[#allocation5 + $0x1c] sm:$0xf]
    %v52 = vld [vmem:[#allocation5 + $0x20] sm:$0xf]
    %v53 = vld [vmem:[#allocation5 + $0x24] sm:$0xf]
    %v54 = vld [vmem:[#allocation5 + $0x28] sm:$0xf]
    %v55 = vld [vmem:[#allocation5 + $0x2c] sm:$0xf]
    %v56 = vld [vmem:[#allocation5 + $0x30] sm:$0xf]
    %v57 = vld [vmem:[#allocation5 + $0x34] sm:$0xf]
    %v58 = vld [vmem:[#allocation5 + $0x38] sm:$0xf]
    %v59 = vld [vmem:[#allocation5 + $0x3c] sm:$0xf]
    %v60 = vld [vmem:[%s2] sm:$0x1]
    %v62 = vlaneseq
    %v63 = vshrl.u32 %v62, 7
    %v64 = vsub.s32 0, %v63
    %v65 = vrot.slane %v60, %v64
    %v83 = vunpack.c.l.b16 %v44
    %v84 = vunpack.c.l.b16 %v45
    %v85 = vunpack.c.l.b16 %v46
    %v86 = vunpack.c.l.b16 %v47
    %v87 = vunpack.c.l.b16 %v48
    %v88 = vunpack.c.l.b16 %v49
    %v89 = vunpack.c.l.b16 %v50
    %v90 = vunpack.c.l.b16 %v51
    %v91 = vunpack.c.l.b16 %v52
    %v92 = vunpack.c.l.b16 %v53
    %v93 = vunpack.c.l.b16 %v54
    %v94 = vunpack.c.l.b16 %v55
    %v95 = vunpack.c.l.b16 %v56
    %v96 = vunpack.c.l.b16 %v57
    %v97 = vunpack.c.l.b16 %v58
    %v98 = vunpack.c.l.b16 %v59
    %v99 = vpack.c.b16 %v84, %v83
    %v100 = vpack.c.b16 %v86, %v85
    %v101 = vpack.c.b16 %v88, %v87
    %v102 = vpack.c.b16 %v90, %v89
    %v103 = vpack.c.b16 %v92, %v91
    %v104 = vpack.c.b16 %v94, %v93
    %v105 = vpack.c.b16 %v96, %v95
    %v106 = vpack.c.b16 %v98, %v97
    %115 = vmatprep.subr.bf16.mxu0 0
    %116 = vmatpush1.bf16.msra.mxu0 %v99
    %117 = vmatprep.subr.bf16.mxu0 0
    %118 = vmatpush1.bf16.msra.mxu0 %v100
    %119 = vmatprep.subr.bf16.mxu0 0
    %120 = vmatpush1.bf16.msra.mxu0 %v101
    %121 = vmatprep.subr.bf16.mxu0 0
    %122 = vmatpush1.bf16.msra.mxu0 %v102
    %123 = vmatprep.subr.bf16.mxu0 0
    %124 = vmatpush1.bf16.msra.mxu0 %v103
    %125 = vmatprep.subr.bf16.mxu0 0
    %126 = vmatpush1.bf16.msra.mxu0 %v104
    %127 = vmatprep.subr.bf16.mxu0 0
    %128 = vmatpush1.bf16.msra.mxu0 %v105
    %129 = vmatprep.subr.bf16.mxu0 0
    %130 = vmatpush1.bf16.msra.mxu0 %v106
    %131 = vmatprep.subr.bf16.mxu0 0
    %132 = vmatpush1.bf16.msra.mxu0 0
    %133 = vmatprep.subr.bf16.mxu0 0
    %134 = vmatpush1.bf16.msra.mxu0 0
    %135 = vmatprep.subr.bf16.mxu0 0
    %136 = vmatpush1.bf16.msra.mxu0 0
    %137 = vmatprep.subr.bf16.mxu0 0
    %138 = vmatpush1.bf16.msra.mxu0 0
    %139 = vmatprep.subr.bf16.mxu0 0
    %140 = vmatpush1.bf16.msra.mxu0 0
    %141 = vmatprep.subr.bf16.mxu0 0
    %142 = vmatpush1.bf16.msra.mxu0 0
    %143 = vmatprep.subr.bf16.mxu0 0
    %144 = vmatpush1.bf16.msra.mxu0 0
    %145 = vmatprep.subr.bf16.mxu0 0
    %146 = vmatpush1.bf16.msra.mxu0 0
    %147 = vmatprep.mubr.bf16.mxu0 0
    %148 = vmatmul.mubr.bf16.gmra.mrb[0].mxu0 %v43
    %v149 = vpop.f32.mrb[0].mxu0
    %v150 = vadd.f32 %v65, %v149
    %v151 = vpop.f32.mrb[0].mxu0
    %v152 = vpop.f32.mrb[0].mxu0
    %v153 = vpop.f32.mrb[0].mxu0
    %154 = vdwg.mxu0
    %155 = vst [vmem:[#allocation7] sm:$0xff] %v150
    // Predicated region
    $region22: #{tpu_custom_call.1} parent=1 // pred_check
      _
    $region23: #{tpu_custom_call.1} parent=1 // pred_check_branch
      %157 = sbr.rel (0) target = $region25
    $region24: #{tpu_custom_call.1} parent=1 // pred_region
      %s159 = ssub.s32 128, 128
      %160 = vsyncadd [#allocation4], %s159
      %s162 = sshll.u32 [#allocation7], 4
      %s163 = int_to_ptr.vmem [resolvable:$true] %s162
      %165 = dma.vmem_to_hbm [thread:$0]  %s163, 128, %s3, [#allocation4]
    $region25: #{tpu_custom_call.1} parent=1 // pred_fallthru
      _
    // Predicated region
    $region26: #{tpu_custom_call.1} parent=1 // pred_check
      _
    $region27: #{tpu_custom_call.1} parent=1 // pred_check_branch
      %167 = sbr.rel (0) target = $region29
    $region28: #{tpu_custom_call.1} parent=1 // pred_region
      %168 = dma.done [#allocation4], 128
    $region29: #{tpu_custom_call.1} parent=1 // pred_fallthru
      _
    %169 = vsyncpa [#allocation3], 1
    %170 = vsyncpa [#allocation6], 1
    %171 = vsyncpa [#allocation4], 1

</llo_original>
